<compile_context>
chip_gen: v6e
topology: v6e:2x2x1
jax: 0.10.0
libtpu: 0.0.40
codegen_flags: <defaults>
</compile_context>

<pallas_src>
import functools

import jax
import jax.numpy as jnp
from jax.experimental import pallas as pl
from jax.experimental.pallas import tpu as pltpu


# ----------------------------- fused kernel ---------------------------------

def _lb_fused_kernel(x_ref, w1_ref, b1_ref, wdw_ref, b2_ref, w2_ref, b3_ref,
                     *rest, H, W, stride, use_residual, btile):
    """Btile images per grid step.  Per image the activation is (C, H*W):
    channels on sublanes, flattened spatial on lanes (lane-dense)."""
    if stride > 1:
        sw_ref, o_ref = rest          # sw: (W, Wo) column-selection matrix
    else:
        (o_ref,) = rest

    HW = H * W
    Ho = (H - 1) // stride + 1
    Wo = (W - 1) // stride + 1

    # Small folded weights: load once per grid step.
    w1 = w1_ref[...]                  # (Cmid, Cin)
    b1 = b1_ref[...]                  # (Cmid, 1)
    wdw = wdw_ref[...]                # (Cmid, 9)
    b2 = b2_ref[...]                  # (Cmid, 1)
    w2 = w2_ref[...]                  # (Cout, Cmid)
    b3 = b3_ref[...]                  # (Cout, 1)
    sw = sw_ref[...] if stride > 1 else None

    # Boundary masks at (1, HW); broadcast over channels inside jnp.where.
    flat = jax.lax.broadcasted_iota(jnp.int32, (1, HW), 1)
    col = flat % W
    m_left = col >= 1                 # position p-1 exists (same row)
    m_right = col <= W - 2            # position p+1 exists (same row)
    m_top = flat >= W                 # position p-W exists (row above)
    m_bot = flat < HW - W             # position p+W exists (row below)

    def one_image(i, carry):
        x = x_ref[i].astype(jnp.float32)                       # (Cin, HW)

        # ---- stage 1: 1x1 expand (BN1 scale folded) + bias + relu6 ----
        h1 = jnp.dot(w1, x, preferred_element_type=jnp.float32)
        h1 = jnp.clip(h1 + b1, 0.0, 6.0)                        # (Cmid, HW)

        # ---- stage 2: 3x3 depthwise, separable-shift form ----
        # out[c,p] = sum_{kh,kw} wdw[c,3kh+kw] * h1[c, p+(kh-1)W+(kw-1)] (masked)
        # 2 horizontal lane rolls shared by all three vertical taps:
        left = jnp.where(m_left, pltpu.roll(h1, shift=1, axis=1), 0.0)        # h1[p-1]
        right = jnp.where(m_right, pltpu.roll(h1, shift=HW - 1, axis=1), 0.0)  # h1[p+1]
        # three horizontal combos (per-channel weights broadcast over lanes):
        acc = wdw[:, 3:4] * left + wdw[:, 4:5] * h1 + wdw[:, 5:6] * right      # kh=1
        g0 = wdw[:, 0:1] * left + wdw[:, 1:2] * h1 + wdw[:, 2:3] * right       # kh=0
        acc = acc + jnp.where(m_top, pltpu.roll(g0, shift=W, axis=1), 0.0)
        g2 = wdw[:, 6:7] * left + wdw[:, 7:8] * h1 + wdw[:, 8:9] * right       # kh=2
        acc = acc + jnp.where(m_bot, pltpu.roll(g2, shift=HW - W, axis=1), 0.0)
        h2 = jnp.clip(acc + b2, 0.0, 6.0)                       # (Cmid, HW)

        # ---- optional stride: Kronecker-factored downselect ----
        # Per output row ho: take the W columns of input row ho*stride (a static
        # lane slice) and pick every stride-th column with a tiny (W, Wo) matmul.
        if stride > 1:
            parts = [
                jnp.dot(h2[:, ho * stride * W: ho * stride * W + W], sw,
                        preferred_element_type=jnp.float32)     # (Cmid, Wo)
                for ho in range(Ho)
            ]
            h2 = parts[0] if Ho == 1 else jnp.concatenate(parts, axis=1)  # (Cmid, Ho*Wo)

        # ---- stage 3: 1x1 project (BN3 scale folded) + bias (+ residual) ----
        y = jnp.dot(w2, h2, preferred_element_type=jnp.float32) + b3
        if use_residual:
            y = y + x                                           # Cin == Cout here
        o_ref[i] = y.astype(o_ref.dtype)
        return carry

    if btile == 1:
        one_image(0, 0)
    else:
        jax.lax.fori_loop(0, btile, one_image, 0, unroll=True)


# ----------------------------- wrapper ---------------------------------------

def _fold_bn(gamma, beta, mean, var, eps=1e-5):
    scale = gamma / jnp.sqrt(var + eps)
    bias = beta - mean * scale
    return scale, bias


def _choose_btile(N, Cin, Cout, Cmid, HW, HWo, itemsize):
    """Images per grid step: big enough DMA blocks to approach the HBM roofline,
    bounded by a conservative VMEM budget (v7x: 64 MiB total), and keeping >=2
    grid steps when possible so both v7x TensorCores get work."""
    per_img_io = (Cin * HW + Cout * HWo) * itemsize              # in + out block bytes
    per_img_live = (Cin + 6 * Cmid) * HW * 4                     # f32 intermediates
    bt = max(1, min(N, (2 << 20) // max(per_img_io, 1)))         # ~2 MiB I/O per step
    budget = 16 << 20
    while bt > 1 and 2 * bt * per_img_io + per_img_live > budget:
        bt -= 1
    while bt > 1 and N // bt < 2:                                # keep >=2 parallel steps
        bt -= 1
    while N % bt:                                                # avoid partial blocks
        bt -= 1
    return bt


def linear_depthwise_block(x_nchw, params, stride=1):
    """Forward of LinearDepthwiseBlock.  Input/output are NCHW (like PyTorch).
    Activations may be float32 or bfloat16 (accumulation is always f32)."""
    N, Cin, H, W = x_nchw.shape
    HW = H * W
    w1 = params["pw_expand"]                               # (Cin, Cmid)
    w_dw = params["dw_conv"]                               # (3, 3, Cmid)
    w2 = params["pw_project"]                              # (Cmid, Cout)
    Cmid, Cout = w1.shape[1], w2.shape[1]
    s1, b1 = _fold_bn(*params["bn1"])
    s2, b2 = _fold_bn(*params["bn2"])
    s3, b3 = _fold_bn(*params["bn3"])
    use_residual = (stride == 1) and (Cin == Cout)

    # Fold BN scales into the conv weights (host side, once per call).
    w1t = (w1 * s1[None, :]).T.astype(jnp.float32)                           # (Cmid, Cin)
    wdw = (w_dw * s2[None, None, :]).reshape(9, Cmid).T.astype(jnp.float32)  # (Cmid, 9)
    w2t = (w2 * s3[None, :]).T.astype(jnp.float32)                           # (Cout, Cmid)
    b1c = b1.reshape(Cmid, 1).astype(jnp.float32)
    b2c = b2.reshape(Cmid, 1).astype(jnp.float32)
    b3c = b3.reshape(Cout, 1).astype(jnp.float32)

    Ho = (H - 1) // stride + 1
    Wo = (W - 1) // stride + 1
    HWo = Ho * Wo

    x_flat = x_nchw.reshape(N, Cin, HW)          # free reshape (NCHW contiguous)
    btile = _choose_btile(N, Cin, Cout, Cmid, HW, HWo, x_flat.dtype.itemsize)
    grid = N // btile

    kernel = functools.partial(_lb_fused_kernel, H=H, W=W, stride=stride,
                               use_residual=use_residual, btile=btile)

    def const_spec(shape):
        # Constant index_map -> block DMA'd once, not per grid step.
        return pl.BlockSpec(shape, lambda n: (0, 0))

    in_specs = [
        pl.BlockSpec((btile, Cin, HW), lambda n: (n, 0, 0)),
        const_spec((Cmid, Cin)),
        const_spec((Cmid, 1)),
        const_spec((Cmid, 9)),
        const_spec((Cmid, 1)),
        const_spec((Cout, Cmid)),
        const_spec((Cout, 1)),
    ]
    args = [x_flat, w1t, b1c, wdw, b2c, w2t, b3c]
    if stride > 1:
        # Tiny (W, Wo) 0/1 column-selection matrix (Kronecker factor).
        sw = (jnp.arange(W)[:, None] == (jnp.arange(Wo) * stride)[None, :]
              ).astype(jnp.float32)
        in_specs.append(const_spec((W, Wo)))
        args.append(sw)

    out = pl.pallas_call(
        kernel,
        out_shape=jax.ShapeDtypeStruct((N, Cout, HWo), x_nchw.dtype),
        grid_spec=pltpu.PrefetchScalarGridSpec(
            num_scalar_prefetch=0,
            grid=(grid,),
            in_specs=in_specs,
            out_specs=pl.BlockSpec((btile, Cout, HWo), lambda n: (n, 0, 0)),
        ),
        compiler_params=pltpu.CompilerParams(
            dimension_semantics=("parallel",)),
    )(*args)

    return out.reshape(N, Cout, Ho, Wo)                    # already NCHW


# ----------------------------- reference (pure JAX) --------------------------

def _reference(x_nchw, params, stride=1):
    x = jnp.transpose(x_nchw, (0, 2, 3, 1))
    w1, w_dw, w2 = params["pw_expand"], params["dw_conv"], params["pw_project"]
    s1, b1 = _fold_bn(*params["bn1"])
    s2, b2 = _fold_bn(*params["bn2"])
    s3, b3 = _fold_bn(*params["bn3"])
    dn = ("NHWC", "HWIO", "NHWC")
    Cmid = w1.shape[1]
    h = jax.lax.conv_general_dilated(x, w1[None, None], (1, 1), "VALID",
                                     dimension_numbers=dn)
    h = jnp.clip(h * s1 + b1, 0.0, 6.0)
    h = jax.lax.conv_general_dilated(h, w_dw.reshape(3, 3, 1, Cmid),
                                     (stride, stride), ((1, 1), (1, 1)),
                                     dimension_numbers=dn,
                                     feature_group_count=Cmid)
    h = jnp.clip(h * s2 + b2, 0.0, 6.0)
    h = jax.lax.conv_general_dilated(h, w2[None, None], (1, 1), "VALID",
                                     dimension_numbers=dn)
    h = h * s3 + b3
    if stride == 1 and x.shape[-1] == w2.shape[1]:
        h = h + x
    return jnp.transpose(h, (0, 3, 1, 2))


# ----------------------------- main ------------------------------------------

if __name__ == "__main__":
    N, Cin, H, W = 4, 4, 16, 16
    Cmid, Cout = 8, 4

    ks = jax.random.split(jax.random.PRNGKey(0), 16)
    x = jax.random.normal(ks[0], (N, Cin, H, W), jnp.float32)

    def bn_params(k0, k1, k2, k3, c):
        return (jax.random.uniform(k0, (c,), jnp.float32, 0.5, 1.5),   # gamma
                0.1 * jax.random.normal(k1, (c,), jnp.float32),        # beta
                0.1 * jax.random.normal(k2, (c,), jnp.float32),        # running mean
                jax.random.uniform(k3, (c,), jnp.float32, 0.5, 1.5))   # running var

    params = {
        "pw_expand": 0.5 * jax.random.normal(ks[1], (Cin, Cmid), jnp.float32),
        "dw_conv":   0.5 * jax.random.normal(ks[2], (3, 3, Cmid), jnp.float32),
        "pw_project": 0.5 * jax.random.normal(ks[3], (Cmid, Cout), jnp.float32),
        "bn1": bn_params(ks[4], ks[5], ks[6], ks[7], Cmid),
        "bn2": bn_params(ks[8], ks[9], ks[10], ks[11], Cmid),
        "bn3": bn_params(ks[12], ks[13], ks[14], ks[15], Cout),
    }

    # stride=1 exercises the residual path; stride=2 the in-kernel downsample.
    for stride in (1, 2):
        out = jax.block_until_ready(linear_depthwise_block(x, params, stride))
        ref = _reference(x, params, stride)
        Ho = (H - 1) // stride + 1
        assert out.shape == (N, Cout, Ho, Ho), (stride, out.shape)
        if not jnp.allclose(out, ref, atol=1e-4, rtol=1e-4):
            raise AssertionError(f"Pallas output mismatch for stride={stride}")

    print("KERNEL_OK")
</pallas_src>

<mosaic_0001>
module attributes {stable_mosaic.version = 11 : i64} {
  func.func @_lb_fused_kernel(%arg0: i32, %arg1: memref<2x4x256xf32, #tpu.memory_space<vmem>>, %arg2: memref<8x4xf32, #tpu.memory_space<vmem>>, %arg3: memref<8x1xf32, #tpu.memory_space<vmem>>, %arg4: memref<8x9xf32, #tpu.memory_space<vmem>>, %arg5: memref<8x1xf32, #tpu.memory_space<vmem>>, %arg6: memref<4x8xf32, #tpu.memory_space<vmem>>, %arg7: memref<4x1xf32, #tpu.memory_space<vmem>>, %arg8: memref<2x4x256xf32, #tpu.memory_space<vmem>>) attributes {dimension_semantics = [#tpu.dimension_semantics<parallel>], iteration_bounds = array<i64: 2>, scalar_prefetch = 0 : i64, scratch_operands = 0 : i64, tpu.core_type = #tpu.core_type<tc>, window_params = [{transform_indices = @transform_0, window_bounds = array<i64: 2, 4, 256>}, {pipeline_mode = #tpu.pipeline_mode<synchronous>, transform_indices = @transform_1, window_bounds = array<i64: 8, 4>}, {pipeline_mode = #tpu.pipeline_mode<synchronous>, transform_indices = @transform_2, window_bounds = array<i64: 8, 1>}, {pipeline_mode = #tpu.pipeline_mode<synchronous>, transform_indices = @transform_3, window_bounds = array<i64: 8, 9>}, {pipeline_mode = #tpu.pipeline_mode<synchronous>, transform_indices = @transform_4, window_bounds = array<i64: 8, 1>}, {pipeline_mode = #tpu.pipeline_mode<synchronous>, transform_indices = @transform_5, window_bounds = array<i64: 4, 8>}, {pipeline_mode = #tpu.pipeline_mode<synchronous>, transform_indices = @transform_6, window_bounds = array<i64: 4, 1>}, {transform_indices = @transform_7, window_bounds = array<i64: 2, 4, 256>}]} {
    %c0 = arith.constant 0 : index
    %c0_0 = arith.constant 0 : index
    %0 = vector.load %arg2[%c0, %c0_0] : memref<8x4xf32, #tpu.memory_space<vmem>>, vector<8x4xf32>
    %c0_1 = arith.constant 0 : index
    %c0_2 = arith.constant 0 : index
    %1 = vector.load %arg3[%c0_1, %c0_2] : memref<8x1xf32, #tpu.memory_space<vmem>>, vector<8x1xf32>
    %c0_3 = arith.constant 0 : index
    %c0_4 = arith.constant 0 : index
    %2 = vector.load %arg4[%c0_3, %c0_4] : memref<8x9xf32, #tpu.memory_space<vmem>>, vector<8x9xf32>
    %c0_5 = arith.constant 0 : index
    %c0_6 = arith.constant 0 : index
    %3 = vector.load %arg5[%c0_5, %c0_6] : memref<8x1xf32, #tpu.memory_space<vmem>>, vector<8x1xf32>
    %c0_7 = arith.constant 0 : index
    %c0_8 = arith.constant 0 : index
    %4 = vector.load %arg6[%c0_7, %c0_8] : memref<4x8xf32, #tpu.memory_space<vmem>>, vector<4x8xf32>
    %c0_9 = arith.constant 0 : index
    %c0_10 = arith.constant 0 : index
    %5 = vector.load %arg7[%c0_9, %c0_10] : memref<4x1xf32, #tpu.memory_space<vmem>>, vector<4x1xf32>
    %6 = tpu.iota {dimensions = array<i32: 1>} : vector<1x256xi32>
    %c16_i32 = arith.constant 16 : i32
    %c0_i32 = arith.constant 0 : i32
    %7 = arith.cmpi eq, %c16_i32, %c0_i32 : i32
    %c1_i32 = arith.constant 1 : i32
    %8 = arith.select %7, %c1_i32, %c16_i32 : i32
    %9 = vector.broadcast %8 : i32 to vector<1x256xi32>
    %10 = arith.remsi %6, %9 : vector<1x256xi32>
    %c0_i32_11 = arith.constant 0 : i32
    %11 = vector.broadcast %c0_i32_11 : i32 to vector<1x256xi32>
    %12 = arith.cmpi ne, %10, %11 : vector<1x256xi32>
    %c0_i32_12 = arith.constant 0 : i32
    %13 = vector.broadcast %c0_i32_12 : i32 to vector<1x256xi32>
    %14 = arith.cmpi slt, %10, %13 : vector<1x256xi32>
    %c0_i32_13 = arith.constant 0 : i32
    %15 = arith.cmpi slt, %8, %c0_i32_13 : i32
    %16 = vector.broadcast %15 : i1 to vector<1x256xi1>
    %17 = vector.broadcast %16 : vector<1x256xi1> to vector<1x256xi1>
    %18 = arith.xori %14, %17 : vector<1x256xi1>
    %19 = arith.andi %18, %12 : vector<1x256xi1>
    %20 = vector.broadcast %8 : i32 to vector<1x256xi32>
    %21 = arith.addi %10, %20 : vector<1x256xi32>
    %22 = arith.select %19, %21, %10 : vector<1x256xi1>, vector<1x256xi32>
    %c1_i32_14 = arith.constant 1 : i32
    %23 = vector.broadcast %c1_i32_14 : i32 to vector<1x256xi32>
    %24 = arith.cmpi sge, %22, %23 : vector<1x256xi32>
    %c14_i32 = arith.constant 14 : i32
    %25 = vector.broadcast %c14_i32 : i32 to vector<1x256xi32>
    %26 = arith.cmpi sle, %22, %25 : vector<1x256xi32>
    %c16_i32_15 = arith.constant 16 : i32
    %27 = vector.broadcast %c16_i32_15 : i32 to vector<1x256xi32>
    %28 = arith.cmpi sge, %6, %27 : vector<1x256xi32>
    %c240_i32 = arith.constant 240 : i32
    %29 = vector.broadcast %c240_i32 : i32 to vector<1x256xi32>
    %30 = arith.cmpi slt, %6, %29 : vector<1x256xi32>
    %c0_i32_16 = arith.constant 0 : i32
    %31 = arith.index_cast %c0_i32_16 : i32 to index
    %c0_17 = arith.constant 0 : index
    %c0_18 = arith.constant 0 : index
    %32 = vector.load %arg1[%31, %c0_17, %c0_18] : memref<2x4x256xf32, #tpu.memory_space<vmem>>, vector<1x4x256xf32>
    %33 = vector.shape_cast %32 : vector<1x4x256xf32> to vector<4x256xf32>
    %cst = arith.constant dense<0.000000e+00> : vector<8x256xf32>
    %34 = tpu.matmul %0, %33, %cst {dimension_numbers = #tpu.dot_dimension_numbers<[1], [0], [0], [1], [0, 0, 1, 1], [], []>} : vector<8x4xf32>, vector<4x256xf32>, vector<8x256xf32> -> vector<8x256xf32>
    %35 = vector.broadcast %1 : vector<8x1xf32> to vector<8x256xf32>
    %36 = arith.addf %34, %35 : vector<8x256xf32>
    %cst_19 = arith.constant 0.000000e+00 : f32
    %cst_20 = arith.constant 6.000000e+00 : f32
    %37 = vector.broadcast %cst_19 : f32 to vector<8x256xf32>
    %38 = arith.maximumf %37, %36 : vector<8x256xf32>
    %39 = vector.broadcast %cst_20 : f32 to vector<8x256xf32>
    %40 = arith.minimumf %39, %38 : vector<8x256xf32>
    %c1_i32_21 = arith.constant 1 : i32
    %41 = tpu.dynamic_rotate %40 by %c1_i32_21 dim 1 : vector<8x256xf32>, i32 -> vector<8x256xf32>
    %cst_22 = arith.constant 0.000000e+00 : f32
    %42 = vector.shape_cast %24 : vector<1x256xi1> to vector<1x256xi1>
    %43 = vector.broadcast %42 : vector<1x256xi1> to vector<8x256xi1>
    %44 = vector.broadcast %cst_22 : f32 to vector<8x256xf32>
    %45 = arith.select %43, %41, %44 : vector<8x256xi1>, vector<8x256xf32>
    %c255_i32 = arith.constant 255 : i32
    %46 = tpu.dynamic_rotate %40 by %c255_i32 dim 1 : vector<8x256xf32>, i32 -> vector<8x256xf32>
    %cst_23 = arith.constant 0.000000e+00 : f32
    %47 = vector.shape_cast %26 : vector<1x256xi1> to vector<1x256xi1>
    %48 = vector.broadcast %47 : vector<1x256xi1> to vector<8x256xi1>
    %49 = vector.broadcast %cst_23 : f32 to vector<8x256xf32>
    %50 = arith.select %48, %46, %49 : vector<8x256xi1>, vector<8x256xf32>
    %51 = vector.extract_strided_slice %2 {offsets = [0, 3], sizes = [8, 1], strides = [1, 1]} : vector<8x9xf32> to vector<8x1xf32>
    %52 = vector.broadcast %51 : vector<8x1xf32> to vector<8x256xf32>
    %53 = arith.mulf %52, %45 : vector<8x256xf32>
    %54 = vector.extract_strided_slice %2 {offsets = [0, 4], sizes = [8, 1], strides = [1, 1]} : vector<8x9xf32> to vector<8x1xf32>
    %55 = vector.broadcast %54 : vector<8x1xf32> to vector<8x256xf32>
    %56 = arith.mulf %55, %40 : vector<8x256xf32>
    %57 = arith.addf %53, %56 : vector<8x256xf32>
    %58 = vector.extract_strided_slice %2 {offsets = [0, 5], sizes = [8, 1], strides = [1, 1]} : vector<8x9xf32> to vector<8x1xf32>
    %59 = vector.broadcast %58 : vector<8x1xf32> to vector<8x256xf32>
    %60 = arith.mulf %59, %50 : vector<8x256xf32>
    %61 = arith.addf %57, %60 : vector<8x256xf32>
    %62 = vector.extract_strided_slice %2 {offsets = [0, 0], sizes = [8, 1], strides = [1, 1]} : vector<8x9xf32> to vector<8x1xf32>
    %63 = vector.broadcast %62 : vector<8x1xf32> to vector<8x256xf32>
    %64 = arith.mulf %63, %45 : vector<8x256xf32>
    %65 = vector.extract_strided_slice %2 {offsets = [0, 1], sizes = [8, 1], strides = [1, 1]} : vector<8x9xf32> to vector<8x1xf32>
    %66 = vector.broadcast %65 : vector<8x1xf32> to vector<8x256xf32>
    %67 = arith.mulf %66, %40 : vector<8x256xf32>
    %68 = arith.addf %64, %67 : vector<8x256xf32>
    %69 = vector.extract_strided_slice %2 {offsets = [0, 2], sizes = [8, 1], strides = [1, 1]} : vector<8x9xf32> to vector<8x1xf32>
    %70 = vector.broadcast %69 : vector<8x1xf32> to vector<8x256xf32>
    %71 = arith.mulf %70, %50 : vector<8x256xf32>
    %72 = arith.addf %68, %71 : vector<8x256xf32>
    %c16_i32_24 = arith.constant 16 : i32
    %73 = tpu.dynamic_rotate %72 by %c16_i32_24 dim 1 : vector<8x256xf32>, i32 -> vector<8x256xf32>
    %cst_25 = arith.constant 0.000000e+00 : f32
    %74 = vector.shape_cast %28 : vector<1x256xi1> to vector<1x256xi1>
    %75 = vector.broadcast %74 : vector<1x256xi1> to vector<8x256xi1>
    %76 = vector.broadcast %cst_25 : f32 to vector<8x256xf32>
    %77 = arith.select %75, %73, %76 : vector<8x256xi1>, vector<8x256xf32>
    %78 = arith.addf %61, %77 : vector<8x256xf32>
    %79 = vector.extract_strided_slice %2 {offsets = [0, 6], sizes = [8, 1], strides = [1, 1]} : vector<8x9xf32> to vector<8x1xf32>
    %80 = vector.broadcast %79 : vector<8x1xf32> to vector<8x256xf32>
    %81 = arith.mulf %80, %45 : vector<8x256xf32>
    %82 = vector.extract_strided_slice %2 {offsets = [0, 7], sizes = [8, 1], strides = [1, 1]} : vector<8x9xf32> to vector<8x1xf32>
    %83 = vector.broadcast %82 : vector<8x1xf32> to vector<8x256xf32>
    %84 = arith.mulf %83, %40 : vector<8x256xf32>
    %85 = arith.addf %81, %84 : vector<8x256xf32>
    %86 = vector.extract_strided_slice %2 {offsets = [0, 8], sizes = [8, 1], strides = [1, 1]} : vector<8x9xf32> to vector<8x1xf32>
    %87 = vector.broadcast %86 : vector<8x1xf32> to vector<8x256xf32>
    %88 = arith.mulf %87, %50 : vector<8x256xf32>
    %89 = arith.addf %85, %88 : vector<8x256xf32>
    %c240_i32_26 = arith.constant 240 : i32
    %90 = tpu.dynamic_rotate %89 by %c240_i32_26 dim 1 : vector<8x256xf32>, i32 -> vector<8x256xf32>
    %cst_27 = arith.constant 0.000000e+00 : f32
    %91 = vector.shape_cast %30 : vector<1x256xi1> to vector<1x256xi1>
    %92 = vector.broadcast %91 : vector<1x256xi1> to vector<8x256xi1>
    %93 = vector.broadcast %cst_27 : f32 to vector<8x256xf32>
    %94 = arith.select %92, %90, %93 : vector<8x256xi1>, vector<8x256xf32>
    %95 = arith.addf %78, %94 : vector<8x256xf32>
    %96 = vector.broadcast %3 : vector<8x1xf32> to vector<8x256xf32>
    %97 = arith.addf %95, %96 : vector<8x256xf32>
    %cst_28 = arith.constant 0.000000e+00 : f32
    %cst_29 = arith.constant 6.000000e+00 : f32
    %98 = vector.broadcast %cst_28 : f32 to vector<8x256xf32>
    %99 = arith.maximumf %98, %97 : vector<8x256xf32>
    %100 = vector.broadcast %cst_29 : f32 to vector<8x256xf32>
    %101 = arith.minimumf %100, %99 : vector<8x256xf32>
    %cst_30 = arith.constant dense<0.000000e+00> : vector<4x256xf32>
    %102 = tpu.matmul %4, %101, %cst_30 {dimension_numbers = #tpu.dot_dimension_numbers<[1], [0], [0], [1], [0, 0, 1, 1], [], []>} : vector<4x8xf32>, vector<8x256xf32>, vector<4x256xf32> -> vector<4x256xf32>
    %103 = vector.broadcast %5 : vector<4x1xf32> to vector<4x256xf32>
    %104 = arith.addf %102, %103 : vector<4x256xf32>
    %105 = arith.addf %104, %33 : vector<4x256xf32>
    %106 = arith.index_cast %c0_i32_16 : i32 to index
    %c0_31 = arith.constant 0 : index
    %c0_32 = arith.constant 0 : index
    %107 = vector.load %arg8[%106, %c0_31, %c0_32] : memref<2x4x256xf32, #tpu.memory_space<vmem>>, vector<1x4x256xf32>
    %108 = vector.shape_cast %107 : vector<1x4x256xf32> to vector<4x256xf32>
    %109 = vector.shape_cast %105 : vector<4x256xf32> to vector<1x4x256xf32>
    tpu.vector_store %arg8[%106, %c0_31, %c0_32], %109 {strides = array<i32>} : memref<2x4x256xf32, #tpu.memory_space<vmem>>, vector<1x4x256xf32>,
    %c1_i32_33 = arith.constant 1 : i32
    %110 = arith.index_cast %c1_i32_33 : i32 to index
    %c0_34 = arith.constant 0 : index
    %c0_35 = arith.constant 0 : index
    %111 = vector.load %arg1[%110, %c0_34, %c0_35] : memref<2x4x256xf32, #tpu.memory_space<vmem>>, vector<1x4x256xf32>
    %112 = vector.shape_cast %111 : vector<1x4x256xf32> to vector<4x256xf32>
    %cst_36 = arith.constant dense<0.000000e+00> : vector<8x256xf32>
    %113 = tpu.matmul %0, %112, %cst_36 {dimension_numbers = #tpu.dot_dimension_numbers<[1], [0], [0], [1], [0, 0, 1, 1], [], []>} : vector<8x4xf32>, vector<4x256xf32>, vector<8x256xf32> -> vector<8x256xf32>
    %114 = vector.broadcast %1 : vector<8x1xf32> to vector<8x256xf32>
    %115 = arith.addf %113, %114 : vector<8x256xf32>
    %cst_37 = arith.constant 0.000000e+00 : f32
    %cst_38 = arith.constant 6.000000e+00 : f32
    %116 = vector.broadcast %cst_37 : f32 to vector<8x256xf32>
    %117 = arith.maximumf %116, %115 : vector<8x256xf32>
    %118 = vector.broadcast %cst_38 : f32 to vector<8x256xf32>
    %119 = arith.minimumf %118, %117 : vector<8x256xf32>
    %c1_i32_39 = arith.constant 1 : i32
    %120 = tpu.dynamic_rotate %119 by %c1_i32_39 dim 1 : vector<8x256xf32>, i32 -> vector<8x256xf32>
    %cst_40 = arith.constant 0.000000e+00 : f32
    %121 = vector.shape_cast %24 : vector<1x256xi1> to vector<1x256xi1>
    %122 = vector.broadcast %121 : vector<1x256xi1> to vector<8x256xi1>
    %123 = vector.broadcast %cst_40 : f32 to vector<8x256xf32>
    %124 = arith.select %122, %120, %123 : vector<8x256xi1>, vector<8x256xf32>
    %c255_i32_41 = arith.constant 255 : i32
    %125 = tpu.dynamic_rotate %119 by %c255_i32_41 dim 1 : vector<8x256xf32>, i32 -> vector<8x256xf32>
    %cst_42 = arith.constant 0.000000e+00 : f32
    %126 = vector.shape_cast %26 : vector<1x256xi1> to vector<1x256xi1>
    %127 = vector.broadcast %126 : vector<1x256xi1> to vector<8x256xi1>
    %128 = vector.broadcast %cst_42 : f32 to vector<8x256xf32>
    %129 = arith.select %127, %125, %128 : vector<8x256xi1>, vector<8x256xf32>
    %130 = vector.extract_strided_slice %2 {offsets = [0, 3], sizes = [8, 1], strides = [1, 1]} : vector<8x9xf32> to vector<8x1xf32>
    %131 = vector.broadcast %130 : vector<8x1xf32> to vector<8x256xf32>
    %132 = arith.mulf %131, %124 : vector<8x256xf32>
    %133 = vector.extract_strided_slice %2 {offsets = [0, 4], sizes = [8, 1], strides = [1, 1]} : vector<8x9xf32> to vector<8x1xf32>
    %134 = vector.broadcast %133 : vector<8x1xf32> to vector<8x256xf32>
    %135 = arith.mulf %134, %119 : vector<8x256xf32>
    %136 = arith.addf %132, %135 : vector<8x256xf32>
    %137 = vector.extract_strided_slice %2 {offsets = [0, 5], sizes = [8, 1], strides = [1, 1]} : vector<8x9xf32> to vector<8x1xf32>
    %138 = vector.broadcast %137 : vector<8x1xf32> to vector<8x256xf32>
    %139 = arith.mulf %138, %129 : vector<8x256xf32>
    %140 = arith.addf %136, %139 : vector<8x256xf32>
    %141 = vector.extract_strided_slice %2 {offsets = [0, 0], sizes = [8, 1], strides = [1, 1]} : vector<8x9xf32> to vector<8x1xf32>
    %142 = vector.broadcast %141 : vector<8x1xf32> to vector<8x256xf32>
    %143 = arith.mulf %142, %124 : vector<8x256xf32>
    %144 = vector.extract_strided_slice %2 {offsets = [0, 1], sizes = [8, 1], strides = [1, 1]} : vector<8x9xf32> to vector<8x1xf32>
    %145 = vector.broadcast %144 : vector<8x1xf32> to vector<8x256xf32>
    %146 = arith.mulf %145, %119 : vector<8x256xf32>
    %147 = arith.addf %143, %146 : vector<8x256xf32>
    %148 = vector.extract_strided_slice %2 {offsets = [0, 2], sizes = [8, 1], strides = [1, 1]} : vector<8x9xf32> to vector<8x1xf32>
    %149 = vector.broadcast %148 : vector<8x1xf32> to vector<8x256xf32>
    %150 = arith.mulf %149, %129 : vector<8x256xf32>
    %151 = arith.addf %147, %150 : vector<8x256xf32>
    %c16_i32_43 = arith.constant 16 : i32
    %152 = tpu.dynamic_rotate %151 by %c16_i32_43 dim 1 : vector<8x256xf32>, i32 -> vector<8x256xf32>
    %cst_44 = arith.constant 0.000000e+00 : f32
    %153 = vector.shape_cast %28 : vector<1x256xi1> to vector<1x256xi1>
    %154 = vector.broadcast %153 : vector<1x256xi1> to vector<8x256xi1>
    %155 = vector.broadcast %cst_44 : f32 to vector<8x256xf32>
    %156 = arith.select %154, %152, %155 : vector<8x256xi1>, vector<8x256xf32>
    %157 = arith.addf %140, %156 : vector<8x256xf32>
    %158 = vector.extract_strided_slice %2 {offsets = [0, 6], sizes = [8, 1], strides = [1, 1]} : vector<8x9xf32> to vector<8x1xf32>
    %159 = vector.broadcast %158 : vector<8x1xf32> to vector<8x256xf32>
    %160 = arith.mulf %159, %124 : vector<8x256xf32>
    %161 = vector.extract_strided_slice %2 {offsets = [0, 7], sizes = [8, 1], strides = [1, 1]} : vector<8x9xf32> to vector<8x1xf32>
    %162 = vector.broadcast %161 : vector<8x1xf32> to vector<8x256xf32>
    %163 = arith.mulf %162, %119 : vector<8x256xf32>
    %164 = arith.addf %160, %163 : vector<8x256xf32>
    %165 = vector.extract_strided_slice %2 {offsets = [0, 8], sizes = [8, 1], strides = [1, 1]} : vector<8x9xf32> to vector<8x1xf32>
    %166 = vector.broadcast %165 : vector<8x1xf32> to vector<8x256xf32>
    %167 = arith.mulf %166, %129 : vector<8x256xf32>
    %168 = arith.addf %164, %167 : vector<8x256xf32>
    %c240_i32_45 = arith.constant 240 : i32
    %169 = tpu.dynamic_rotate %168 by %c240_i32_45 dim 1 : vector<8x256xf32>, i32 -> vector<8x256xf32>
    %cst_46 = arith.constant 0.000000e+00 : f32
    %170 = vector.shape_cast %30 : vector<1x256xi1> to vector<1x256xi1>
    %171 = vector.broadcast %170 : vector<1x256xi1> to vector<8x256xi1>
    %172 = vector.broadcast %cst_46 : f32 to vector<8x256xf32>
    %173 = arith.select %171, %169, %172 : vector<8x256xi1>, vector<8x256xf32>
    %174 = arith.addf %157, %173 : vector<8x256xf32>
    %175 = vector.broadcast %3 : vector<8x1xf32> to vector<8x256xf32>
    %176 = arith.addf %174, %175 : vector<8x256xf32>
    %cst_47 = arith.constant 0.000000e+00 : f32
    %cst_48 = arith.constant 6.000000e+00 : f32
    %177 = vector.broadcast %cst_47 : f32 to vector<8x256xf32>
    %178 = arith.maximumf %177, %176 : vector<8x256xf32>
    %179 = vector.broadcast %cst_48 : f32 to vector<8x256xf32>
    %180 = arith.minimumf %179, %178 : vector<8x256xf32>
    %cst_49 = arith.constant dense<0.000000e+00> : vector<4x256xf32>
    %181 = tpu.matmul %4, %180, %cst_49 {dimension_numbers = #tpu.dot_dimension_numbers<[1], [0], [0], [1], [0, 0, 1, 1], [], []>} : vector<4x8xf32>, vector<8x256xf32>, vector<4x256xf32> -> vector<4x256xf32>
    %182 = vector.broadcast %5 : vector<4x1xf32> to vector<4x256xf32>
    %183 = arith.addf %181, %182 : vector<4x256xf32>
    %184 = arith.addf %183, %112 : vector<4x256xf32>
    %185 = arith.index_cast %c1_i32_33 : i32 to index
    %c0_50 = arith.constant 0 : index
    %c0_51 = arith.constant 0 : index
    %186 = vector.load %arg8[%185, %c0_50, %c0_51] : memref<2x4x256xf32, #tpu.memory_space<vmem>>, vector<1x4x256xf32>
    %187 = vector.shape_cast %186 : vector<1x4x256xf32> to vector<4x256xf32>
    %188 = vector.shape_cast %184 : vector<4x256xf32> to vector<1x4x256xf32>
    tpu.vector_store %arg8[%185, %c0_50, %c0_51], %188 {strides = array<i32>} : memref<2x4x256xf32, #tpu.memory_space<vmem>>, vector<1x4x256xf32>,
    %c2_i32 = arith.constant 2 : i32
    return
  }
  func.func @transform_0(%arg0: i32) -> (i32, i32, i32) {
    %c0_i32 = arith.constant 0 : i32
    %c0_i32_0 = arith.constant 0 : i32
    %c0_i32_1 = arith.constant 0 : i32
    return %arg0, %c0_i32, %c0_i32_0 : i32, i32, i32
  }
  func.func @transform_1(%arg0: i32) -> (i32, i32) {
    %c0_i32 = arith.constant 0 : i32
    %c0_i32_0 = arith.constant 0 : i32
    %c0_i32_1 = arith.constant 0 : i32
    return %c0_i32, %c0_i32_0 : i32, i32
  }
  func.func @transform_2(%arg0: i32) -> (i32, i32) {
    %c0_i32 = arith.constant 0 : i32
    %c0_i32_0 = arith.constant 0 : i32
    %c0_i32_1 = arith.constant 0 : i32
    return %c0_i32, %c0_i32_0 : i32, i32
  }
  func.func @transform_3(%arg0: i32) -> (i32, i32) {
    %c0_i32 = arith.constant 0 : i32
    %c0_i32_0 = arith.constant 0 : i32
    %c0_i32_1 = arith.constant 0 : i32
    return %c0_i32, %c0_i32_0 : i32, i32
  }
  func.func @transform_4(%arg0: i32) -> (i32, i32) {
    %c0_i32 = arith.constant 0 : i32
    %c0_i32_0 = arith.constant 0 : i32
    %c0_i32_1 = arith.constant 0 : i32
    return %c0_i32, %c0_i32_0 : i32, i32
  }
  func.func @transform_5(%arg0: i32) -> (i32, i32) {
    %c0_i32 = arith.constant 0 : i32
    %c0_i32_0 = arith.constant 0 : i32
    %c0_i32_1 = arith.constant 0 : i32
    return %c0_i32, %c0_i32_0 : i32, i32
  }
  func.func @transform_6(%arg0: i32) -> (i32, i32) {
    %c0_i32 = arith.constant 0 : i32
    %c0_i32_0 = arith.constant 0 : i32
    %c0_i32_1 = arith.constant 0 : i32
    return %c0_i32, %c0_i32_0 : i32, i32
  }
  func.func @transform_7(%arg0: i32) -> (i32, i32, i32) {
    %c0_i32 = arith.constant 0 : i32
    %c0_i32_0 = arith.constant 0 : i32
    %c0_i32_1 = arith.constant 0 : i32
    return %arg0, %c0_i32, %c0_i32_0 : i32, i32, i32
  }
}

</mosaic_0001>

<llo_original>
// kernel: tpu_custom_call.1
$region0: #{tpu_custom_call.1}
  #allocation0 [shape = 'u32[]', space=smem, size = 0x4, offset = 0x4, fixed_abs, tag = 'smem constant byte address 0x4 - core index']
  #allocation1 [shape = 'u32[144,128]{1,0:T(1,128)}', space=vmem, size = 0x12000, scoped, tag = 'internal scratch']
  %s0 = inlined_call_operand.vmem [shape: f32[4,4,256], index: 0, kind: input, shape index: {}]
  %s1 = inlined_call_operand.vmem [shape: f32[8,4], index: 1, kind: input, shape index: {}]
  %s2 = inlined_call_operand.vmem [shape: f32[8,1], index: 2, kind: input, shape index: {}]
  %s3 = inlined_call_operand.vmem [shape: f32[8,9], index: 3, kind: input, shape index: {}]
  %s4 = inlined_call_operand.vmem [shape: f32[8,1], index: 4, kind: input, shape index: {}]
  %s5 = inlined_call_operand.vmem [shape: f32[4,8], index: 5, kind: input, shape index: {}]
  %s6 = inlined_call_operand.vmem [shape: f32[4,1], index: 6, kind: input, shape index: {}]
  %s7 = inlined_call_operand.hbm [shape: f32[4,4,256], index: 7, kind: output, shape index: {}]
  %s8 = sld [smem:[#allocation0]]
  $region61: #{tpu_custom_call.1} parent=0
    _
  %s10 = ssub.s32 1, %s8
  %s11 = scalar_select 0, %s10, %s8
  $region1: #{tpu_custom_call.1} parent=0
    #allocation2 [shape = 'u8[16384]{0}', space=vmem, size = 0x4000, scoped, tag = 'output window, operand 0']
    #allocation3 [shape = 's32[2]{0}', space=sflag, size = 0x8, scoped, tag = 'scoped memory for tpu_custom_call.1']
    %12 = vsyncpa [#allocation3], 0
    %s13 = scalar_lea.sflag [#allocation3], 1
    %14 = vsyncpa %s13, 0
    loop: start=0, step=1, limit=4
    $region2: #{tpu_custom_call.1} parent=1 // loop_pre_header
      _
    $region3: #{tpu_custom_call.1} parent=1 // loop_header
      %s16 = sphi 0, %s20
      %p17 = scmp.ge.s32.totalorder %s16, 4
      %s26 = sphi 0, %s28
      %s29 = sphi 0, %s26
      %s30 = sphi 0, %s29
      %s46 = sphi 0, %s30
      %s50 = sphi 0, %s50
      %s52 = sphi 0, %s50
      %s53 = sphi 0, %s52
      %s67 = sphi 0, %s53
      %s71 = sphi 0, %s71
      %s73 = sphi 0, %s71
      %s74 = sphi 0, %s73
      %s88 = sphi 0, %s74
      %s92 = sphi 0, %s92
      %s94 = sphi 0, %s92
      %s95 = sphi 0, %s94
      %s109 = sphi 0, %s95
      %s113 = sphi 0, %s113
      %s115 = sphi 0, %s113
      %s116 = sphi 0, %s115
      %s130 = sphi 0, %s116
      %s134 = sphi 0, %s134
      %s136 = sphi 0, %s134
      %s137 = sphi 0, %s136
      %s151 = sphi 0, %s137
      %s155 = sphi 0, %s155
      %s157 = sphi 0, %s155
      %s158 = sphi 0, %s157
      %s172 = sphi 0, %s158
      %s178 = sphi 0, %s180
      %s181 = sphi 0, %s178
      %s182 = sphi 0, %s181
      %s198 = sphi 0, %s182
    $region4: #{tpu_custom_call.1} parent=1 // loop_header_branch
      %19 = sbr.rel (%p17) target = $region8
    $region5: #{tpu_custom_call.1} parent=1 // loop_body
      %s21 = ssub.s32 %s16, 1
      %s22 = ssub.s32 %s16, 2
      %s23 = sadd.s32 %s16, 1
      %s24 = ssub.s32 %s16, %s23
      %p25 = scmp.eq.s32.totalorder %s24, 0
      %s27 = sadd.s32 %s26, 1
      %s28 = scalar_select %p25, %s26, %s27
      %p31 = pneg %p25
      %p32 = scmp.eq.s32.totalorder %s16, 1
      %p33 = por %p31, %p32
      %p34 = scmp.ne.s32.totalorder %s26, %s29
      %p35 = scmp.eq.s32.totalorder %s16, 0
      %p36 = por %p34, %p35
      %p37 = scmp.ne.s32.totalorder %s26, %s29
      %p38 = scmp.eq.s32.totalorder %s21, 1
      %p39 = por %p37, %p38
      %p40 = scmp.ne.s32.totalorder %s29, %s30
      %p41 = scmp.eq.s32.totalorder %s21, 0
      %p42 = por %p40, %p41
      %p43 = scmp.ne.s32.totalorder %s29, %s30
      %p44 = scmp.eq.s32.totalorder %s22, 1
      %p45 = por %p43, %p44
      %p47 = scmp.ne.s32.totalorder %s30, %s46
      %p48 = scmp.eq.s32.totalorder %s22, 0
      %p49 = por %p47, %p48
      %s51 = sadd.s32 %s50, 1
      %p54 = scmp.eq.s32.totalorder %s16, 1
      %p55 = scmp.ne.s32.totalorder %s50, %s52
      %p56 = scmp.eq.s32.totalorder %s16, 0
      %p57 = por %p55, %p56
      %p58 = scmp.ne.s32.totalorder %s50, %s52
      %p59 = scmp.eq.s32.totalorder %s21, 1
      %p60 = por %p58, %p59
      %p61 = scmp.ne.s32.totalorder %s52, %s53
      %p62 = scmp.eq.s32.totalorder %s21, 0
      %p63 = por %p61, %p62
      %p64 = scmp.ne.s32.totalorder %s52, %s53
      %p65 = scmp.eq.s32.totalorder %s22, 1
      %p66 = por %p64, %p65
      %p68 = scmp.ne.s32.totalorder %s53, %s67
      %p69 = scmp.eq.s32.totalorder %s22, 0
      %p70 = por %p68, %p69
      %s72 = sadd.s32 %s71, 1
      %p75 = scmp.eq.s32.totalorder %s16, 1
      %p76 = scmp.ne.s32.totalorder %s71, %s73
      %p77 = scmp.eq.s32.totalorder %s16, 0
      %p78 = por %p76, %p77
      %p79 = scmp.ne.s32.totalorder %s71, %s73
      %p80 = scmp.eq.s32.totalorder %s21, 1
      %p81 = por %p79, %p80
      %p82 = scmp.ne.s32.totalorder %s73, %s74
      %p83 = scmp.eq.s32.totalorder %s21, 0
      %p84 = por %p82, %p83
      %p85 = scmp.ne.s32.totalorder %s73, %s74
      %p86 = scmp.eq.s32.totalorder %s22, 1
      %p87 = por %p85, %p86
      %p89 = scmp.ne.s32.totalorder %s74, %s88
      %p90 = scmp.eq.s32.totalorder %s22, 0
      %p91 = por %p89, %p90
      %s93 = sadd.s32 %s92, 1
      %p96 = scmp.eq.s32.totalorder %s16, 1
      %p97 = scmp.ne.s32.totalorder %s92, %s94
      %p98 = scmp.eq.s32.totalorder %s16, 0
      %p99 = por %p97, %p98
      %p100 = scmp.ne.s32.totalorder %s92, %s94
      %p101 = scmp.eq.s32.totalorder %s21, 1
      %p102 = por %p100, %p101
      %p103 = scmp.ne.s32.totalorder %s94, %s95
      %p104 = scmp.eq.s32.totalorder %s21, 0
      %p105 = por %p103, %p104
      %p106 = scmp.ne.s32.totalorder %s94, %s95
      %p107 = scmp.eq.s32.totalorder %s22, 1
      %p108 = por %p106, %p107
      %p110 = scmp.ne.s32.totalorder %s95, %s109
      %p111 = scmp.eq.s32.totalorder %s22, 0
      %p112 = por %p110, %p111
      %s114 = sadd.s32 %s113, 1
      %p117 = scmp.eq.s32.totalorder %s16, 1
      %p118 = scmp.ne.s32.totalorder %s113, %s115
      %p119 = scmp.eq.s32.totalorder %s16, 0
      %p120 = por %p118, %p119
      %p121 = scmp.ne.s32.totalorder %s113, %s115
      %p122 = scmp.eq.s32.totalorder %s21, 1
      %p123 = por %p121, %p122
      %p124 = scmp.ne.s32.totalorder %s115, %s116
      %p125 = scmp.eq.s32.totalorder %s21, 0
      %p126 = por %p124, %p125
      %p127 = scmp.ne.s32.totalorder %s115, %s116
      %p128 = scmp.eq.s32.totalorder %s22, 1
      %p129 = por %p127, %p128
      %p131 = scmp.ne.s32.totalorder %s116, %s130
      %p132 = scmp.eq.s32.totalorder %s22, 0
      %p133 = por %p131, %p132
      %s135 = sadd.s32 %s134, 1
      %p138 = scmp.eq.s32.totalorder %s16, 1
      %p139 = scmp.ne.s32.totalorder %s134, %s136
      %p140 = scmp.eq.s32.totalorder %s16, 0
      %p141 = por %p139, %p140
      %p142 = scmp.ne.s32.totalorder %s134, %s136
      %p143 = scmp.eq.s32.totalorder %s21, 1
      %p144 = por %p142, %p143
      %p145 = scmp.ne.s32.totalorder %s136, %s137
      %p146 = scmp.eq.s32.totalorder %s21, 0
      %p147 = por %p145, %p146
      %p148 = scmp.ne.s32.totalorder %s136, %s137
      %p149 = scmp.eq.s32.totalorder %s22, 1
      %p150 = por %p148, %p149
      %p152 = scmp.ne.s32.totalorder %s137, %s151
      %p153 = scmp.eq.s32.totalorder %s22, 0
      %p154 = por %p152, %p153
      %s156 = sadd.s32 %s155, 1
      %p159 = scmp.eq.s32.totalorder %s16, 1
      %p160 = scmp.ne.s32.totalorder %s155, %s157
      %p161 = scmp.eq.s32.totalorder %s16, 0
      %p162 = por %p160, %p161
      %p163 = scmp.ne.s32.totalorder %s155, %s157
      %p164 = scmp.eq.s32.totalorder %s21, 1
      %p165 = por %p163, %p164
      %p166 = scmp.ne.s32.totalorder %s157, %s158
      %p167 = scmp.eq.s32.totalorder %s21, 0
      %p168 = por %p166, %p167
      %p169 = scmp.ne.s32.totalorder %s157, %s158
      %p170 = scmp.eq.s32.totalorder %s22, 1
      %p171 = por %p169, %p170
      %p173 = scmp.ne.s32.totalorder %s158, %s172
      %p174 = scmp.eq.s32.totalorder %s22, 0
      %p175 = por %p173, %p174
      %s176 = ssub.s32 %s16, %s23
      %p177 = scmp.eq.s32.totalorder %s176, 0
      %s179 = sadd.s32 %s178, 1
      %s180 = scalar_select %p177, %s178, %s179
      %p183 = pneg %p177
      %p184 = scmp.eq.s32.totalorder %s16, 1
      %p185 = por %p183, %p184
      %p186 = scmp.ne.s32.totalorder %s178, %s181
      %p187 = scmp.eq.s32.totalorder %s16, 0
      %p188 = por %p186, %p187
      %p189 = scmp.ne.s32.totalorder %s178, %s181
      %p190 = scmp.eq.s32.totalorder %s21, 1
      %p191 = por %p189, %p190
      %p192 = scmp.ne.s32.totalorder %s181, %s182
      %p193 = scmp.eq.s32.totalorder %s21, 0
      %p194 = por %p192, %p193
      %p195 = scmp.ne.s32.totalorder %s181, %s182
      %p196 = scmp.eq.s32.totalorder %s22, 1
      %p197 = por %p195, %p196
      %p199 = scmp.ne.s32.totalorder %s182, %s198
      %p200 = scmp.eq.s32.totalorder %s22, 0
      %p201 = por %p199, %p200
      %p202 = scmp.le.s32.totalorder 1, %s16
      %p203 = scmp.lt.s32.totalorder %s16, 3
      %p204 = pnand %p202, %p203
      %p205 = pneg %p204
      // Predicated region
      $region9: #{tpu_custom_call.1} parent=5 // pred_check
        _
      $region10: #{tpu_custom_call.1} parent=5 // pred_check_branch
        %207 = sbr.rel (%p204) target = $region12
      $region11: #{tpu_custom_call.1} parent=5 // pred_region
        %s208 = ssub.s32 %s16, 1
        // Predicated region
        $region13: #{tpu_custom_call.1} parent=11 // pred_check
          %p209 = pneg %p63
        $region14: #{tpu_custom_call.1} parent=11 // pred_check_branch
          %211 = sbr.rel (%p209) target = $region16
        $region15: #{tpu_custom_call.1} parent=11 // pred_region
          _
        $region16: #{tpu_custom_call.1} parent=11 // pred_fallthru
          _
        // Predicated region
        $region17: #{tpu_custom_call.1} parent=11 // pred_check
          %p212 = pneg %p84
        $region18: #{tpu_custom_call.1} parent=11 // pred_check_branch
          %214 = sbr.rel (%p212) target = $region20
        $region19: #{tpu_custom_call.1} parent=11 // pred_region
          _
        $region20: #{tpu_custom_call.1} parent=11 // pred_fallthru
          _
        // Predicated region
        $region21: #{tpu_custom_call.1} parent=11 // pred_check
          %p215 = pneg %p105
        $region22: #{tpu_custom_call.1} parent=11 // pred_check_branch
          %217 = sbr.rel (%p215) target = $region24
        $region23: #{tpu_custom_call.1} parent=11 // pred_region
          _
        $region24: #{tpu_custom_call.1} parent=11 // pred_fallthru
          _
        // Predicated region
        $region25: #{tpu_custom_call.1} parent=11 // pred_check
          %p218 = pneg %p126
        $region26: #{tpu_custom_call.1} parent=11 // pred_check_branch
          %220 = sbr.rel (%p218) target = $region28
        $region27: #{tpu_custom_call.1} parent=11 // pred_region
          _
        $region28: #{tpu_custom_call.1} parent=11 // pred_fallthru
          _
        // Predicated region
        $region29: #{tpu_custom_call.1} parent=11 // pred_check
          %p221 = pneg %p147
        $region30: #{tpu_custom_call.1} parent=11 // pred_check_branch
          %223 = sbr.rel (%p221) target = $region32
        $region31: #{tpu_custom_call.1} parent=11 // pred_region
          _
        $region32: #{tpu_custom_call.1} parent=11 // pred_fallthru
          _
        // Predicated region
        $region33: #{tpu_custom_call.1} parent=11 // pred_check
          %p224 = pneg %p168
        $region34: #{tpu_custom_call.1} parent=11 // pred_check_branch
          %226 = sbr.rel (%p224) target = $region36
        $region35: #{tpu_custom_call.1} parent=11 // pred_region
          _
        $region36: #{tpu_custom_call.1} parent=11 // pred_fallthru
          _
      $region12: #{tpu_custom_call.1} parent=5 // pred_fallthru
        _
      %p227 = scmp.lt.s32.totalorder %s16, 2
      // Predicated region
      $region37: #{tpu_custom_call.1} parent=5 // pred_check
        %p228 = pneg %p227
      $region38: #{tpu_custom_call.1} parent=5 // pred_check_branch
        %230 = sbr.rel (%p228) target = $region40
      $region39: #{tpu_custom_call.1} parent=5 // pred_region
        // Predicated region
        $region41: #{tpu_custom_call.1} parent=39 // pred_check
          %p231 = pneg %p36
        $region42: #{tpu_custom_call.1} parent=39 // pred_check_branch
          %233 = sbr.rel (%p231) target = $region44
        $region43: #{tpu_custom_call.1} parent=39 // pred_region
          %s234 = smul.u32 2, %s16
          %p235 = scmp.lt.s32.totalorder %s234, 3
          %s236 = scalar_select %p235, %s234, 3
          %s237 = smul.addr %s236, 2
          %s238 = smul.addr %s237, 4
          %s239 = scalar_lea.vmem %s0, %s238
          %s240 = smul.u32 2, %s16
        $region44: #{tpu_custom_call.1} parent=39 // pred_fallthru
          _
      $region40: #{tpu_custom_call.1} parent=5 // pred_fallthru
        _
      %p241 = scmp.le.s32.totalorder 1, %s16
      %p242 = scmp.lt.s32.totalorder %s16, 3
      %p243 = pnand %p241, %p242
      %p244 = pneg %p243
      // Predicated region
      $region45: #{tpu_custom_call.1} parent=5 // pred_check
        _
      $region46: #{tpu_custom_call.1} parent=5 // pred_check_branch
        %246 = sbr.rel (%p243) target = $region48
      $region47: #{tpu_custom_call.1} parent=5 // pred_region
        %s247 = ssub.s32 %s16, 1
        %s248 = smul.u32 2, %s21
        %p249 = scmp.lt.s32.totalorder %s248, 3
        %s250 = scalar_select %p249, %s248, 3
        %s251 = smul.addr %s250, 2
        %s252 = smul.addr %s251, 4
        %s253 = scalar_lea.vmem %s0, %s252
        %p254 = pneg %p42
        %p255 = pneg %p39
        %p256 = pneg %p63
        %p257 = pneg %p60
        %p258 = pneg %p84
        %p259 = pneg %p81
        %p260 = pneg %p105
        %p261 = pneg %p102
        %p262 = pneg %p126
        %p263 = pneg %p123
        %p264 = pneg %p147
        %p265 = pneg %p144
        %p266 = pneg %p168
        %p267 = pneg %p165
        %p268 = pneg %p194
        %p269 = pneg %p191
        %s270 = sand.u32 %s181, 1
        %s271 = scalar_lea.sflag [#allocation3], %s270
        %s272 = sand.u32 %s181, 1
        %s273 = smul.addr %s272, 16
        %s274 = scalar_lea.vmem [#allocation2], %s273
        %s275 = smul.u32 2, %s21
        %p276 = scmp.lt.s32.totalorder %s275, 3
        %s277 = scalar_select %p276, %s275, 3
        %s278 = smul.addr %s277, 2
        %s279 = smul.addr %s278, 4
        %s280 = scalar_lea.vmem %s0, %s279
        %s281 = smul.u32 2, %s21
        %s282 = smul.u32 2, %s21
        %v283 = vld [vmem:[%s1] sm:$0xff]
        %v284 = vld [vmem:[%s2] sm:$0xff]
        %v285 = vld [vmem:[%s3] sm:$0xff]
        %v286 = vld [vmem:[%s4] sm:$0xff]
        %v287 = vld [vmem:[%s5] sm:$0xf]
        %v288 = vld [vmem:[%s6] sm:$0xf]
        %v289 = vlaneseq
        %v290 = vand.u32 %v289, 127
        %v291 = vadd.s32 %v290, 128
        %vm292 = vcmp.lt.s32.totalorder %v290, 0
        %v293 = vsub.s32 0, %v290
        %v294 = vsel %vm292, %v293, %v290
        %v295 = vshrl.u32 %v294, 4
        %v296 = vand.u32 %v294, 15
        %v297 = vsub.s32 0, %v296
        %v298 = vsel %vm292, %v297, %v296
        %vm299 = vcmp.lt.s32.totalorder %v291, 0
        %v300 = vsub.s32 0, %v291
        %v301 = vsel %vm299, %v300, %v291
        %v302 = vshrl.u32 %v301, 4
        %v303 = vand.u32 %v301, 15
        %v304 = vsub.s32 0, %v303
        %v305 = vsel %vm299, %v304, %v303
        %vm306 = vcmp.ne.s32.totalorder %v298, 0
        %vm307 = vcmp.ne.s32.totalorder %v305, 0
        %vm308 = vcmp.lt.s32.totalorder %v298, 0
        %vm309 = vcmp.lt.s32.totalorder %v305, 0
        %vm310 = vmand %vm308, %vm306
        %vm311 = vmand %vm309, %vm307
        %v312 = vadd.s32 %v298, 16
        %v313 = vadd.s32 %v305, 16
        %v314 = vsel %vm310, %v312, %v298
        %v315 = vsel %vm311, %v313, %v305
        %vm316 = vcmp.ge.s32.totalorder %v314, 1
        %vm317 = vcmp.ge.s32.totalorder %v315, 1
        %vm318 = vcmp.le.s32.totalorder %v314, 14
        %vm319 = vcmp.le.s32.totalorder %v315, 14
        %vm320 = vcmp.ge.s32.totalorder %v290, 16
        %vm321 = vcmp.ge.s32.totalorder %v291, 16
        %vm322 = vcmp.lt.s32.totalorder %v290, 240
        %vm323 = vcmp.lt.s32.totalorder %v291, 240
        %v324 = vld [vmem:[%s280] sm:$0xff]
        %326 = vset.pattern.permute.xlu0 0
        %327 = vperm.xlu0 %326, %v284
        %v328 = vpop.permute.xlu0 %327
        %v331 = vcombine.high %v324, %v324
        %vm332 = vcmask 31744
        %v334 = vsel %vm332, %v283, 0
        %vm336 = vcmask 1043456
        %v337 = vsel %vm336, %v324, 0
        %v339 = vsel %vm336, %v331, 0
        %341 = vmatprep.subr.mxu0 0.0
        %342 = vmatpush1.msra.mxu0 0.0
        %343 = vmatprep.subr.mxu0 0.0
        %344 = vmatpush1.msra.mxu0 0.0
        %345 = vmatprep.subr.mxu0 0.0
        %346 = vmatpush1.msra.mxu0 0.0
        %347 = vmatprep.subr.mxu0 0.0
        %348 = vmatpush1.msra.mxu0 0.0
        %349 = vmatprep.subr.mxu0 0.0
        %350 = vmatpush1.msra.mxu0 0.0
        %351 = vmatprep.subr.mxu0 0.0
        %352 = vmatpush1.msra.mxu0 0.0
        %353 = vmatprep.subr.mxu0 0.0
        %354 = vmatpush1.msra.mxu0 0.0
        %355 = vmatprep.subr.mxu0 0.0
        %356 = vmatpush1.msra.mxu0 0.0
        %357 = vmatprep.subr.mxu0 0.0
        %358 = vmatpush1.msra.mxu0 0.0
        %359 = vmatprep.subr.mxu0 0.0
        %360 = vmatpush1.msra.mxu0 0.0
        %361 = vmatprep.subr.mxu0 0.0
        %362 = vmatpush1.msra.mxu0 0.0
        %363 = vmatprep.subr.mxu0 0.0
        %364 = vmatpush1.msra.mxu0 0.0
        %365 = vmatprep.subr.mxu0 0.0
        %366 = vmatpush1.msra.mxu0 0.0
        %367 = vmatprep.subr.mxu0 0.0
        %368 = vmatpush1.msra.mxu0 0.0
        %369 = vmatprep.subr.mxu0 0.0
        %370 = vmatpush1.msra.mxu0 0.0
        %371 = vmatprep.subr.mxu0 %v339
        %372 = vmatpush1.msra.mxu0 %v337
        %373 = vmatprep.subr.mxu0 0.0
        %374 = vmatpush2.msra.mxu0 0.0
        %375 = vmatprep.subr.mxu0 0.0
        %376 = vmatpush2.msra.mxu0 0.0
        %377 = vmatprep.subr.mxu0 0.0
        %378 = vmatpush2.msra.mxu0 0.0
        %379 = vmatprep.subr.mxu0 0.0
        %380 = vmatpush2.msra.mxu0 0.0
        %381 = vmatprep.subr.mxu0 0.0
        %382 = vmatpush2.msra.mxu0 0.0
        %383 = vmatprep.subr.mxu0 0.0
        %384 = vmatpush2.msra.mxu0 0.0
        %385 = vmatprep.subr.mxu0 0.0
        %386 = vmatpush2.msra.mxu0 0.0
        %387 = vmatprep.subr.mxu0 0.0
        %388 = vmatpush2.msra.mxu0 0.0
        %389 = vmatprep.subr.mxu0 0.0
        %390 = vmatpush2.msra.mxu0 0.0
        %391 = vmatprep.subr.mxu0 0.0
        %392 = vmatpush2.msra.mxu0 0.0
        %393 = vmatprep.subr.mxu0 0.0
        %394 = vmatpush2.msra.mxu0 0.0
        %395 = vmatprep.subr.mxu0 0.0
        %396 = vmatpush2.msra.mxu0 0.0
        %397 = vmatprep.subr.mxu0 0.0
        %398 = vmatpush2.msra.mxu0 0.0
        %399 = vmatprep.subr.mxu0 0.0
        %400 = vmatpush2.msra.mxu0 0.0
        %401 = vmatprep.subr.mxu0 0.0
        %402 = vmatpush2.msra.mxu0 0.0
        %403 = vmatprep.subr.mxu0 0.0
        %404 = vmatpush2.msra.mxu0 0.0
        %405 = vmatprep.mubr.f32.mxu0 0.0
        %406 = vmatmul.mubr.f32.gmra.mxu0 %v334
        %v407 = vpop.f32.mrf.mxu0
        %v408 = vadd.f32 %v328, %v407
        %v409 = vpop.f32.mrf.mxu0
        %v410 = vadd.f32 %v328, %v409
        %411 = vdwg.mxu0
        %v412 = vmax.f32 %v408, 0.0
        %v413 = vmax.f32 %v410, 0.0
        %v414 = vmin.f32 %v412, 6.0
        %v415 = vmin.f32 %v413, 6.0
        %416 = vrot.lane.b32.xlu0 %v414, 1
        %v417 = vpop.permute.xlu0 %416
        %418 = vrot.lane.b32.xlu0 %v415, 1
        %v419 = vpop.permute.xlu0 %418
        %vm420 = vcmp.lt.s32.totalorder %v290, 1
        %v421 = vsel %vm420, %v417, %v419
        %v422 = vsel %vm420, %v419, %v417
        %v423 = vsel %vm316, 1, 0
        %v424 = vsel %vm317, 1, 0
        %vm425 = vcmp.eq.s32.totalorder %v423, 1
        %vm426 = vcmp.eq.s32.totalorder %v424, 1
        %v427 = vsel %vm425, %v422, 0.0
        %v428 = vsel %vm426, %v421, 0.0
        %429 = vrot.lane.b32.xlu0 %v414, 127
        %v430 = vpop.permute.xlu0 %429
        %431 = vrot.lane.b32.xlu0 %v415, 127
        %v432 = vpop.permute.xlu0 %431
        %vm433 = vcmp.lt.s32.totalorder %v290, 127
        %v434 = vsel %vm433, %v430, %v432
        %v435 = vsel %vm433, %v432, %v430
        %v436 = vsel %vm318, 1, 0
        %v437 = vsel %vm319, 1, 0
        %vm438 = vcmp.eq.s32.totalorder %v436, 1
        %vm439 = vcmp.eq.s32.totalorder %v437, 1
        %v440 = vsel %vm438, %v434, 0.0
        %v441 = vsel %vm439, %v435, 0.0
        %443 = vset.pattern.permute.xlu0 3
        %444 = vperm.xlu0 %443, %v285
        %v445 = vpop.permute.xlu0 %444
        %v447 = vmul.f32 %v445, %v427
        %v448 = vmul.f32 %v445, %v428
        %449 = vset.pattern.permute.xlu0 4
        %450 = vperm.xlu0 %449, %v285
        %v451 = vpop.permute.xlu0 %450
        %v453 = vmul.f32 %v451, %v414
        %v454 = vmul.f32 %v451, %v415
        %v455 = vadd.f32 %v447, %v453
        %v456 = vadd.f32 %v448, %v454
        %457 = vset.pattern.permute.xlu0 5
        %458 = vperm.xlu0 %457, %v285
        %v459 = vpop.permute.xlu0 %458
        %v461 = vmul.f32 %v459, %v440
        %v462 = vmul.f32 %v459, %v441
        %v463 = vadd.f32 %v455, %v461
        %v464 = vadd.f32 %v456, %v462
        %465 = vset.pattern.permute.xlu0 0
        %466 = vperm.xlu0 %465, %v285
        %v467 = vpop.permute.xlu0 %466
        %v469 = vmul.f32 %v467, %v427
        %v470 = vmul.f32 %v467, %v428
        %471 = vset.pattern.permute.xlu0 1
        %472 = vperm.xlu0 %471, %v285
        %v473 = vpop.permute.xlu0 %472
        %v475 = vmul.f32 %v473, %v414
        %v476 = vmul.f32 %v473, %v415
        %v477 = vadd.f32 %v469, %v475
        %v478 = vadd.f32 %v470, %v476
        %479 = vset.pattern.permute.xlu0 2
        %480 = vperm.xlu0 %479, %v285
        %v481 = vpop.permute.xlu0 %480
        %v483 = vmul.f32 %v481, %v440
        %v484 = vmul.f32 %v481, %v441
        %v485 = vadd.f32 %v477, %v483
        %v486 = vadd.f32 %v478, %v484
        %487 = vrot.lane.b32.xlu0 %v485, 16
        %v488 = vpop.permute.xlu0 %487
        %489 = vrot.lane.b32.xlu0 %v486, 16
        %v490 = vpop.permute.xlu0 %489
        %vm491 = vcmp.lt.s32.totalorder %v290, 16
        %v492 = vsel %vm491, %v488, %v490
        %v493 = vsel %vm491, %v490, %v488
        %v494 = vsel %vm320, 1, 0
        %v495 = vsel %vm321, 1, 0
        %vm496 = vcmp.eq.s32.totalorder %v494, 1
        %vm497 = vcmp.eq.s32.totalorder %v495, 1
        %v498 = vsel %vm496, %v493, 0.0
        %v499 = vsel %vm497, %v492, 0.0
        %v500 = vadd.f32 %v463, %v498
        %v501 = vadd.f32 %v464, %v499
        %502 = vset.pattern.permute.xlu0 6
        %503 = vperm.xlu0 %502, %v285
        %v504 = vpop.permute.xlu0 %503
        %v506 = vmul.f32 %v504, %v427
        %v507 = vmul.f32 %v504, %v428
        %508 = vset.pattern.permute.xlu0 7
        %509 = vperm.xlu0 %508, %v285
        %v510 = vpop.permute.xlu0 %509
        %v512 = vmul.f32 %v510, %v414
        %v513 = vmul.f32 %v510, %v415
        %v514 = vadd.f32 %v506, %v512
        %v515 = vadd.f32 %v507, %v513
        %516 = vset.pattern.permute.xlu0 8
        %517 = vperm.xlu0 %516, %v285
        %v518 = vpop.permute.xlu0 %517
        %v520 = vmul.f32 %v518, %v440
        %v521 = vmul.f32 %v518, %v441
        %v522 = vadd.f32 %v514, %v520
        %v523 = vadd.f32 %v515, %v521
        %524 = vrot.lane.b32.xlu0 %v522, 112
        %v525 = vpop.permute.xlu0 %524
        %526 = vrot.lane.b32.xlu0 %v523, 112
        %v527 = vpop.permute.xlu0 %526
        %vm528 = vcmp.lt.s32.totalorder %v290, 112
        %v529 = vsel %vm528, %v525, %v527
        %v530 = vsel %vm528, %v527, %v525
        %v531 = vsel %vm322, 1, 0
        %v532 = vsel %vm323, 1, 0
        %vm533 = vcmp.eq.s32.totalorder %v531, 1
        %vm534 = vcmp.eq.s32.totalorder %v532, 1
        %v535 = vsel %vm533, %v529, 0.0
        %v536 = vsel %vm534, %v530, 0.0
        %v537 = vadd.f32 %v500, %v535
        %v538 = vadd.f32 %v501, %v536
        %540 = vset.pattern.permute.xlu0 0
        %541 = vperm.xlu0 %540, %v286
        %v542 = vpop.permute.xlu0 %541
        %v544 = vadd.f32 %v537, %v542
        %v545 = vadd.f32 %v538, %v542
        %v546 = vmax.f32 %v544, 0.0
        %v547 = vmax.f32 %v545, 0.0
        %v548 = vmin.f32 %v546, 6.0
        %v549 = vmin.f32 %v547, 6.0
        %551 = vset.pattern.permute.xlu0 0
        %552 = vperm.xlu0 %551, %v288
        %v553 = vpop.permute.xlu0 %552
        %vm555 = vcmask 64512
        %v557 = vsel %vm555, %v287, 0
        %559 = vmatprep.subr.mxu0 0.0
        %560 = vmatpush1.msra.mxu0 0.0
        %561 = vmatprep.subr.mxu0 0.0
        %562 = vmatpush1.msra.mxu0 0.0
        %563 = vmatprep.subr.mxu0 0.0
        %564 = vmatpush1.msra.mxu0 0.0
        %565 = vmatprep.subr.mxu0 0.0
        %566 = vmatpush1.msra.mxu0 0.0
        %567 = vmatprep.subr.mxu0 0.0
        %568 = vmatpush1.msra.mxu0 0.0
        %569 = vmatprep.subr.mxu0 0.0
        %570 = vmatpush1.msra.mxu0 0.0
        %571 = vmatprep.subr.mxu0 0.0
        %572 = vmatpush1.msra.mxu0 0.0
        %573 = vmatprep.subr.mxu0 0.0
        %574 = vmatpush1.msra.mxu0 0.0
        %575 = vmatprep.subr.mxu0 0.0
        %576 = vmatpush1.msra.mxu0 0.0
        %577 = vmatprep.subr.mxu0 0.0
        %578 = vmatpush1.msra.mxu0 0.0
        %579 = vmatprep.subr.mxu0 0.0
        %580 = vmatpush1.msra.mxu0 0.0
        %581 = vmatprep.subr.mxu0 0.0
        %582 = vmatpush1.msra.mxu0 0.0
        %583 = vmatprep.subr.mxu0 0.0
        %584 = vmatpush1.msra.mxu0 0.0
        %585 = vmatprep.subr.mxu0 0.0
        %586 = vmatpush1.msra.mxu0 0.0
        %587 = vmatprep.subr.mxu0 0.0
        %588 = vmatpush1.msra.mxu0 0.0
        %589 = vmatprep.subr.mxu0 %v549
        %590 = vmatpush1.msra.mxu0 %v548
        %591 = vmatprep.subr.mxu0 0.0
        %592 = vmatpush2.msra.mxu0 0.0
        %593 = vmatprep.subr.mxu0 0.0
        %594 = vmatpush2.msra.mxu0 0.0
        %595 = vmatprep.subr.mxu0 0.0
        %596 = vmatpush2.msra.mxu0 0.0
        %597 = vmatprep.subr.mxu0 0.0
        %598 = vmatpush2.msra.mxu0 0.0
        %599 = vmatprep.subr.mxu0 0.0
        %600 = vmatpush2.msra.mxu0 0.0
        %601 = vmatprep.subr.mxu0 0.0
        %602 = vmatpush2.msra.mxu0 0.0
        %603 = vmatprep.subr.mxu0 0.0
        %604 = vmatpush2.msra.mxu0 0.0
        %605 = vmatprep.subr.mxu0 0.0
        %606 = vmatpush2.msra.mxu0 0.0
        %607 = vmatprep.subr.mxu0 0.0
        %608 = vmatpush2.msra.mxu0 0.0
        %609 = vmatprep.subr.mxu0 0.0
        %610 = vmatpush2.msra.mxu0 0.0
        %611 = vmatprep.subr.mxu0 0.0
        %612 = vmatpush2.msra.mxu0 0.0
        %613 = vmatprep.subr.mxu0 0.0
        %614 = vmatpush2.msra.mxu0 0.0
        %615 = vmatprep.subr.mxu0 0.0
        %616 = vmatpush2.msra.mxu0 0.0
        %617 = vmatprep.subr.mxu0 0.0
        %618 = vmatpush2.msra.mxu0 0.0
        %619 = vmatprep.subr.mxu0 0.0
        %620 = vmatpush2.msra.mxu0 0.0
        %621 = vmatprep.subr.mxu0 0.0
        %622 = vmatpush2.msra.mxu0 0.0
        %623 = vmatprep.mubr.f32.mxu0 0.0
        %624 = vmatmul.mubr.f32.gmra.mxu0 %v557
        %v625 = vpop.f32.mrf.mxu0
        %v626 = vadd.f32 %v553, %v625
        %v627 = vpop.f32.mrf.mxu0
        %v628 = vadd.f32 %v553, %v627
        %629 = vdwg.mxu0
        %v631 = vadd.f32 %v626, %v324
        %v632 = vadd.f32 %v628, %v331
        %v635 = vcombine.low %v631, %v632
        %637 = vst [vmem:[%s274] sm:$0xff] %v635
        %s638 = scalar_lea.vmem %s280, 8
        %v639 = vld [vmem:[%s638] sm:$0xff]
        %v641 = vcombine.high %v639, %v639
        %v642 = vsel %vm336, %v639, 0
        %v644 = vsel %vm336, %v641, 0
        %646 = vmatprep.subr.mxu0 0.0
        %647 = vmatpush1.msra.mxu0 0.0
        %648 = vmatprep.subr.mxu0 0.0
        %649 = vmatpush1.msra.mxu0 0.0
        %650 = vmatprep.subr.mxu0 0.0
        %651 = vmatpush1.msra.mxu0 0.0
        %652 = vmatprep.subr.mxu0 0.0
        %653 = vmatpush1.msra.mxu0 0.0
        %654 = vmatprep.subr.mxu0 0.0
        %655 = vmatpush1.msra.mxu0 0.0
        %656 = vmatprep.subr.mxu0 0.0
        %657 = vmatpush1.msra.mxu0 0.0
        %658 = vmatprep.subr.mxu0 0.0
        %659 = vmatpush1.msra.mxu0 0.0
        %660 = vmatprep.subr.mxu0 0.0
        %661 = vmatpush1.msra.mxu0 0.0
        %662 = vmatprep.subr.mxu0 0.0
        %663 = vmatpush1.msra.mxu0 0.0
        %664 = vmatprep.subr.mxu0 0.0
        %665 = vmatpush1.msra.mxu0 0.0
        %666 = vmatprep.subr.mxu0 0.0
        %667 = vmatpush1.msra.mxu0 0.0
        %668 = vmatprep.subr.mxu0 0.0
        %669 = vmatpush1.msra.mxu0 0.0
        %670 = vmatprep.subr.mxu0 0.0
        %671 = vmatpush1.msra.mxu0 0.0
        %672 = vmatprep.subr.mxu0 0.0
        %673 = vmatpush1.msra.mxu0 0.0
        %674 = vmatprep.subr.mxu0 0.0
        %675 = vmatpush1.msra.mxu0 0.0
        %676 = vmatprep.subr.mxu0 %v644
        %677 = vmatpush1.msra.mxu0 %v642
        %678 = vmatprep.subr.mxu0 0.0
        %679 = vmatpush2.msra.mxu0 0.0
        %680 = vmatprep.subr.mxu0 0.0
        %681 = vmatpush2.msra.mxu0 0.0
        %682 = vmatprep.subr.mxu0 0.0
        %683 = vmatpush2.msra.mxu0 0.0
        %684 = vmatprep.subr.mxu0 0.0
        %685 = vmatpush2.msra.mxu0 0.0
        %686 = vmatprep.subr.mxu0 0.0
        %687 = vmatpush2.msra.mxu0 0.0
        %688 = vmatprep.subr.mxu0 0.0
        %689 = vmatpush2.msra.mxu0 0.0
        %690 = vmatprep.subr.mxu0 0.0
        %691 = vmatpush2.msra.mxu0 0.0
        %692 = vmatprep.subr.mxu0 0.0
        %693 = vmatpush2.msra.mxu0 0.0
        %694 = vmatprep.subr.mxu0 0.0
        %695 = vmatpush2.msra.mxu0 0.0
        %696 = vmatprep.subr.mxu0 0.0
        %697 = vmatpush2.msra.mxu0 0.0
        %698 = vmatprep.subr.mxu0 0.0
        %699 = vmatpush2.msra.mxu0 0.0
        %700 = vmatprep.subr.mxu0 0.0
        %701 = vmatpush2.msra.mxu0 0.0
        %702 = vmatprep.subr.mxu0 0.0
        %703 = vmatpush2.msra.mxu0 0.0
        %704 = vmatprep.subr.mxu0 0.0
        %705 = vmatpush2.msra.mxu0 0.0
        %706 = vmatprep.subr.mxu0 0.0
        %707 = vmatpush2.msra.mxu0 0.0
        %708 = vmatprep.subr.mxu0 0.0
        %709 = vmatpush2.msra.mxu0 0.0
        %710 = vmatprep.mubr.f32.mxu0 0.0
        %711 = vmatmul.mubr.f32.gmra.mxu0 %v334
        %v712 = vpop.f32.mrf.mxu0
        %v713 = vadd.f32 %v328, %v712
        %v714 = vpop.f32.mrf.mxu0
        %v715 = vadd.f32 %v328, %v714
        %716 = vdwg.mxu0
        %v717 = vmax.f32 %v713, 0.0
        %v718 = vmax.f32 %v715, 0.0
        %v719 = vmin.f32 %v717, 6.0
        %v720 = vmin.f32 %v718, 6.0
        %721 = vrot.lane.b32.xlu0 %v719, 1
        %v722 = vpop.permute.xlu0 %721
        %723 = vrot.lane.b32.xlu0 %v720, 1
        %v724 = vpop.permute.xlu0 %723
        %v725 = vsel %vm420, %v722, %v724
        %v726 = vsel %vm420, %v724, %v722
        %v727 = vsel %vm425, %v726, 0.0
        %v728 = vsel %vm426, %v725, 0.0
        %729 = vrot.lane.b32.xlu0 %v719, 127
        %v730 = vpop.permute.xlu0 %729
        %731 = vrot.lane.b32.xlu0 %v720, 127
        %v732 = vpop.permute.xlu0 %731
        %v733 = vsel %vm433, %v730, %v732
        %v734 = vsel %vm433, %v732, %v730
        %v735 = vsel %vm438, %v733, 0.0
        %v736 = vsel %vm439, %v734, 0.0
        %v737 = vmul.f32 %v445, %v727
        %v738 = vmul.f32 %v445, %v728
        %v739 = vmul.f32 %v451, %v719
        %v740 = vmul.f32 %v451, %v720
        %v741 = vadd.f32 %v737, %v739
        %v742 = vadd.f32 %v738, %v740
        %v743 = vmul.f32 %v459, %v735
        %v744 = vmul.f32 %v459, %v736
        %v745 = vadd.f32 %v741, %v743
        %v746 = vadd.f32 %v742, %v744
        %v747 = vmul.f32 %v467, %v727
        %v748 = vmul.f32 %v467, %v728
        %v749 = vmul.f32 %v473, %v719
        %v750 = vmul.f32 %v473, %v720
        %v751 = vadd.f32 %v747, %v749
        %v752 = vadd.f32 %v748, %v750
        %v753 = vmul.f32 %v481, %v735
        %v754 = vmul.f32 %v481, %v736
        %v755 = vadd.f32 %v751, %v753
        %v756 = vadd.f32 %v752, %v754
        %757 = vrot.lane.b32.xlu0 %v755, 16
        %v758 = vpop.permute.xlu0 %757
        %759 = vrot.lane.b32.xlu0 %v756, 16
        %v760 = vpop.permute.xlu0 %759
        %v761 = vsel %vm491, %v758, %v760
        %v762 = vsel %vm491, %v760, %v758
        %v763 = vsel %vm496, %v762, 0.0
        %v764 = vsel %vm497, %v761, 0.0
        %v765 = vadd.f32 %v745, %v763
        %v766 = vadd.f32 %v746, %v764
        %v767 = vmul.f32 %v504, %v727
        %v768 = vmul.f32 %v504, %v728
        %v769 = vmul.f32 %v510, %v719
        %v770 = vmul.f32 %v510, %v720
        %v771 = vadd.f32 %v767, %v769
        %v772 = vadd.f32 %v768, %v770
        %v773 = vmul.f32 %v518, %v735
        %v774 = vmul.f32 %v518, %v736
        %v775 = vadd.f32 %v771, %v773
        %v776 = vadd.f32 %v772, %v774
        %777 = vrot.lane.b32.xlu0 %v775, 112
        %v778 = vpop.permute.xlu0 %777
        %779 = vrot.lane.b32.xlu0 %v776, 112
        %v780 = vpop.permute.xlu0 %779
        %v781 = vsel %vm528, %v778, %v780
        %v782 = vsel %vm528, %v780, %v778
        %v783 = vsel %vm533, %v781, 0.0
        %v784 = vsel %vm534, %v782, 0.0
        %v785 = vadd.f32 %v765, %v783
        %v786 = vadd.f32 %v766, %v784
        %v787 = vadd.f32 %v785, %v542
        %v788 = vadd.f32 %v786, %v542
        %v789 = vmax.f32 %v787, 0.0
        %v790 = vmax.f32 %v788, 0.0
        %v791 = vmin.f32 %v789, 6.0
        %v792 = vmin.f32 %v790, 6.0
        %793 = vmatprep.subr.mxu0 0.0
        %794 = vmatpush1.msra.mxu0 0.0
        %795 = vmatprep.subr.mxu0 0.0
        %796 = vmatpush1.msra.mxu0 0.0
        %797 = vmatprep.subr.mxu0 0.0
        %798 = vmatpush1.msra.mxu0 0.0
        %799 = vmatprep.subr.mxu0 0.0
        %800 = vmatpush1.msra.mxu0 0.0
        %801 = vmatprep.subr.mxu0 0.0
        %802 = vmatpush1.msra.mxu0 0.0
        %803 = vmatprep.subr.mxu0 0.0
        %804 = vmatpush1.msra.mxu0 0.0
        %805 = vmatprep.subr.mxu0 0.0
        %806 = vmatpush1.msra.mxu0 0.0
        %807 = vmatprep.subr.mxu0 0.0
        %808 = vmatpush1.msra.mxu0 0.0
        %809 = vmatprep.subr.mxu0 0.0
        %810 = vmatpush1.msra.mxu0 0.0
        %811 = vmatprep.subr.mxu0 0.0
        %812 = vmatpush1.msra.mxu0 0.0
        %813 = vmatprep.subr.mxu0 0.0
        %814 = vmatpush1.msra.mxu0 0.0
        %815 = vmatprep.subr.mxu0 0.0
        %816 = vmatpush1.msra.mxu0 0.0
        %817 = vmatprep.subr.mxu0 0.0
        %818 = vmatpush1.msra.mxu0 0.0
        %819 = vmatprep.subr.mxu0 0.0
        %820 = vmatpush1.msra.mxu0 0.0
        %821 = vmatprep.subr.mxu0 0.0
        %822 = vmatpush1.msra.mxu0 0.0
        %823 = vmatprep.subr.mxu0 %v792
        %824 = vmatpush1.msra.mxu0 %v791
        %825 = vmatprep.subr.mxu0 0.0
        %826 = vmatpush2.msra.mxu0 0.0
        %827 = vmatprep.subr.mxu0 0.0
        %828 = vmatpush2.msra.mxu0 0.0
        %829 = vmatprep.subr.mxu0 0.0
        %830 = vmatpush2.msra.mxu0 0.0
        %831 = vmatprep.subr.mxu0 0.0
        %832 = vmatpush2.msra.mxu0 0.0
        %833 = vmatprep.subr.mxu0 0.0
        %834 = vmatpush2.msra.mxu0 0.0
        %835 = vmatprep.subr.mxu0 0.0
        %836 = vmatpush2.msra.mxu0 0.0
        %837 = vmatprep.subr.mxu0 0.0
        %838 = vmatpush2.msra.mxu0 0.0
        %839 = vmatprep.subr.mxu0 0.0
        %840 = vmatpush2.msra.mxu0 0.0
        %841 = vmatprep.subr.mxu0 0.0
        %842 = vmatpush2.msra.mxu0 0.0
        %843 = vmatprep.subr.mxu0 0.0
        %844 = vmatpush2.msra.mxu0 0.0
        %845 = vmatprep.subr.mxu0 0.0
        %846 = vmatpush2.msra.mxu0 0.0
        %847 = vmatprep.subr.mxu0 0.0
        %848 = vmatpush2.msra.mxu0 0.0
        %849 = vmatprep.subr.mxu0 0.0
        %850 = vmatpush2.msra.mxu0 0.0
        %851 = vmatprep.subr.mxu0 0.0
        %852 = vmatpush2.msra.mxu0 0.0
        %853 = vmatprep.subr.mxu0 0.0
        %854 = vmatpush2.msra.mxu0 0.0
        %855 = vmatprep.subr.mxu0 0.0
        %856 = vmatpush2.msra.mxu0 0.0
        %857 = vmatprep.mubr.f32.mxu0 0.0
        %858 = vmatmul.mubr.f32.gmra.mxu0 %v557
        %v859 = vpop.f32.mrf.mxu0
        %v860 = vadd.f32 %v553, %v859
        %v861 = vpop.f32.mrf.mxu0
        %v862 = vadd.f32 %v553, %v861
        %863 = vdwg.mxu0
        %v865 = vadd.f32 %v860, %v639
        %v866 = vadd.f32 %v862, %v641
        %v869 = vcombine.low %v865, %v866
        %s871 = scalar_lea.vmem %s274, 8 [#allocation2]
        %872 = vst [vmem:[%s871] sm:$0xff] %v869
        %s873 = sand.u32 %s181, 1
        %s874 = scalar_lea.sflag [#allocation3], %s873
        %s875 = sand.u32 %s181, 1
        %s876 = smul.addr %s875, 16
        %s877 = scalar_lea.vmem [#allocation2], %s876
        // Predicated region
        $region49: #{tpu_custom_call.1} parent=47 // pred_check
          %p878 = pneg %p191
        $region50: #{tpu_custom_call.1} parent=47 // pred_check_branch
          %880 = sbr.rel (%p878) target = $region52
        $region51: #{tpu_custom_call.1} parent=47 // pred_region
          %s881 = smul.u32 2, %s21
          %s883 = ssub.s32 256, 256
          %884 = vsyncadd %s874, %s883
          %s885 = smul.addr %s881, 2
          %s886 = smul.addr %s885, 64
          %s887 = scalar_lea.hbm %s7, %s886
          %s888 = sshll.u32 %s877, 4
          %s889 = int_to_ptr.vmem [resolvable:$true] %s888
          %894 = dma.vmem_to_hbm [thread:$0]  %s889, 256, %s887, %s874, 128, 128, 8
        $region52: #{tpu_custom_call.1} parent=47 // pred_fallthru
          _
      $region48: #{tpu_custom_call.1} parent=5 // pred_fallthru
        _
      %p895 = scmp.le.s32.totalorder 2, %s16
      // Predicated region
      $region53: #{tpu_custom_call.1} parent=5 // pred_check
        %p896 = pneg %p895
      $region54: #{tpu_custom_call.1} parent=5 // pred_check_branch
        %898 = sbr.rel (%p896) target = $region56
      $region55: #{tpu_custom_call.1} parent=5 // pred_region
        %s899 = ssub.s32 %s16, 2
        // Predicated region
        $region57: #{tpu_custom_call.1} parent=55 // pred_check
          %p900 = pneg %p197
        $region58: #{tpu_custom_call.1} parent=55 // pred_check_branch
          %902 = sbr.rel (%p900) target = $region60
        $region59: #{tpu_custom_call.1} parent=55 // pred_region
          %s903 = sand.u32 %s182, 1
          %s904 = scalar_lea.sflag [#allocation3], %s903
          %s905 = sand.u32 %s182, 1
          %s906 = smul.addr %s905, 16
          %s907 = scalar_lea.vmem [#allocation2], %s906
          %908 = dma.done %s904, 256
        $region60: #{tpu_custom_call.1} parent=55 // pred_fallthru
          _
      $region56: #{tpu_custom_call.1} parent=5 // pred_fallthru
        _
    $region6: #{tpu_custom_call.1} parent=1 // loop_footer
      %s20 = sadd.s32 1, %s16
    $region7: #{tpu_custom_call.1} parent=1 // loop_footer_branch
      %15 = sbr.rel target = $region3
    $region8: #{tpu_custom_call.1} parent=1 // loop_exit
      _
    %909 = vsyncpa [#allocation3], 1
    %s910 = scalar_lea.sflag [#allocation3], 1
    %911 = vsyncpa %s910, 1

</llo_original>
